<compile_context>
chip_gen: v7x
topology: tpu7x:2x2x1
jax: 0.10.0
libtpu: 0.0.40
codegen_flags: <defaults>
</compile_context>

<pallas_src>
import functools

import jax
import jax.numpy as jnp
from jax.experimental import pallas as pl
from jax.experimental.pallas import tpu as pltpu

LN_EPS = 1e-5
_MXU_DTYPE = jnp.bfloat16          # the MXU has no native f32 path on v5e/v6e/v7x


def _round_up(x, m):
    return ((x + m - 1) // m) * m


# --------------------------------------------------------------------------- #
# Kernels
# --------------------------------------------------------------------------- #
def _sepfc_norm_kernel(x_ref, wt_ref, cs_ref, b_ref, o_ref):
    """Per-row LayerNorm + per-class Linear, with the LN folded onto the matmul
    RESULT:  out = rstd * (x @ W_eff - mu * colsum(W_eff)) + b_eff.
    x feeds the MXU in bf16; all LayerNorm statistics stay f32."""
    x = x_ref[...]
    xf = x.astype(jnp.float32)                                   # [TB, D]
    mu = jnp.mean(xf, axis=-1, keepdims=True)                    # [TB, 1]
    xc = xf - mu
    var = jnp.mean(xc * xc, axis=-1, keepdims=True)              # two-pass variance
    rstd = jax.lax.rsqrt(var + LN_EPS)                           # [TB, 1]
    s = jnp.dot(x.astype(_MXU_DTYPE), wt_ref[...],
                preferred_element_type=jnp.float32)              # [TB, C_pad]
    out = rstd * (s - mu * cs_ref[...]) + b_ref[...]
    o_ref[...] = out.astype(o_ref.dtype)


def _sepfc_plain_kernel(x_ref, wt_ref, b_ref, o_ref):
    """Identity + per-class Linear(in_dim, 1) == one [TB,D]x[D,C_pad] matmul + bias."""
    s = jnp.dot(x_ref[...].astype(_MXU_DTYPE), wt_ref[...],
                preferred_element_type=jnp.float32)
    o_ref[...] = (s + b_ref[...]).astype(o_ref.dtype)


# --------------------------------------------------------------------------- #
# Hardware / capability queries (cached, evaluated OUTSIDE the jit)
# --------------------------------------------------------------------------- #
def _probe_kernel(x_ref, o_ref):
    o_ref[...] = x_ref[...] + 1.0


@functools.lru_cache(maxsize=None)
def _single_buffer_supported():
    """True iff pipeline_mode=pl.Buffered(1) lowers/compiles on this Pallas build."""
    try:
        fn = pl.pallas_call(
            _probe_kernel,
            out_shape=jax.ShapeDtypeStruct((16, 128), jnp.float32),
            grid=(2,),
            in_specs=[pl.BlockSpec((8, 128), lambda i: (0, 0),
                                   pipeline_mode=pl.Buffered(1))],
            out_specs=pl.BlockSpec((8, 128), lambda i: (i, 0)),
            compiler_params=pltpu.CompilerParams(dimension_semantics=("parallel",)),
        )
        jax.jit(fn).lower(jax.ShapeDtypeStruct((8, 128), jnp.float32)).compile()
        return True
    except Exception:
        return False


@functools.lru_cache(maxsize=None)
def _vmem_limit_cap():
    """~75% of this generation's physical VMEM per TensorCore
    (v5e/v6e: 128 MiB -> 96 MiB, v7x: 64 MiB -> 48 MiB).  Falls back to the
    smallest known part so the limit is always physically valid."""
    try:
        cap = int(pltpu.get_tpu_info().vmem_capacity_bytes)
    except Exception:
        cap = 64 * 1024 * 1024
    return max(16 << 20, (cap * 3) // 4)


# --------------------------------------------------------------------------- #
# Tiling
# --------------------------------------------------------------------------- #
def _pick_block_b(batch, d, c_pad, requested, x_bytes, out_bytes,
                  param_bytes, budget, row_mult):
    """Largest batch tile <= `requested` (multiple of row_mult) whose pipeline
    buffers fit `budget`.  Forces >= 2 grid steps whenever the batch allows so
    v7x's second TensorCore gets work under "parallel" semantics."""
    bb = min(requested, _round_up(batch, row_mult))
    if bb >= batch and batch > row_mult:           # grid would otherwise be (1,)
        bb = (batch + 1) // 2
    bb = max(row_mult, _round_up(bb, row_mult))
    while bb > row_mult:
        need = param_bytes + 2 * bb * (d * x_bytes + c_pad * out_bytes)
        if need <= budget:
            break
        bb = max(row_mult, _round_up(bb // 2, row_mult))
    return bb


# --------------------------------------------------------------------------- #
# Forward
# --------------------------------------------------------------------------- #
@functools.partial(jax.jit,
                   static_argnames=("norm", "block_b", "single_buf", "vmem_cap"))
def _sepfc_forward_impl(x, weight, bias, gamma, beta, *,
                        norm, block_b, single_buf, vmem_cap):
    B, D = x.shape
    C = weight.shape[0]
    out_dtype = x.dtype

    # ---- Grid-invariant parameter folding (done once, same jit) -----------------
    wf = weight.astype(jnp.float32)
    if norm:
        w_eff = gamma.astype(jnp.float32) * wf                           # [C, D]
        b_eff = jnp.sum(beta.astype(jnp.float32) * wf, axis=-1) + bias.astype(jnp.float32)
    else:
        w_eff = wf
        b_eff = bias.astype(jnp.float32)

    # bf16 weights feed the MXU at its native rate; the per-class column sum is
    # taken over the SAME bf16 values so the in-kernel mean correction exactly
    # matches the matmul operand.
    w_mxu = w_eff.astype(_MXU_DTYPE)                                     # [C, D]
    col_sum = jnp.sum(w_mxu.astype(jnp.float32), axis=-1)                # [C]

    # ---- Lane-dense C; dtype-aware batch tile; generation-aware VMEM budget -----
    C_pad = _round_up(C, 128)
    x_bytes = jnp.dtype(x.dtype).itemsize
    out_bytes = jnp.dtype(out_dtype).itemsize
    row_mult = 8 if x_bytes >= 4 else 32          # sub-32-bit dtypes pack sublanes
    n_param_buf = 1 if single_buf else 2          # weight single-buffered if supported
    param_bytes = n_param_buf * D * C_pad * 2 + 4 * (2 * C_pad * 4)      # weight + colsum/bias
    budget = max(8 << 20, vmem_cap - (4 << 20))
    bb = _pick_block_b(B, D, C_pad, block_b, x_bytes, out_bytes,
                       param_bytes, budget, row_mult)
    B_pad = _round_up(B, bb)

    wt = jnp.pad(w_mxu.T, ((0, 0), (0, C_pad - C)))                      # [D, C_pad] bf16
    cs = jnp.pad(col_sum.reshape(1, C), ((0, 0), (0, C_pad - C)))        # [1, C_pad] f32
    b2 = jnp.pad(b_eff.reshape(1, C), ((0, 0), (0, C_pad - C)))          # [1, C_pad] f32
    xp = jnp.pad(x, ((0, B_pad - B), (0, 0)))                            # [B_pad, D] native dtype

    grid = (B_pad // bb,)
    param_kw = {"pipeline_mode": pl.Buffered(1)} if single_buf else {}
    x_spec = pl.BlockSpec((bb, D), lambda i: (i, 0))
    wt_spec = pl.BlockSpec((D, C_pad), lambda i: (0, 0), **param_kw)
    vec_spec = pl.BlockSpec((1, C_pad), lambda i: (0, 0), **param_kw)
    out_spec = pl.BlockSpec((bb, C_pad), lambda i: (i, 0))

    vmem_need = (param_bytes
                 + 2 * bb * (D * x_bytes + C_pad * out_bytes)            # x / out streams
                 + bb * (2 * D + C_pad) * 4                              # in-kernel f32 temps
                 + (2 << 20))                                            # compiler headroom
    vmem_limit = int(min(max(vmem_need, 16 << 20), vmem_cap))

    if norm:
        kernel = _sepfc_norm_kernel
        in_specs = [x_spec, wt_spec, vec_spec, vec_spec]
        operands = (xp, wt, cs, b2)
    else:
        kernel = _sepfc_plain_kernel
        in_specs = [x_spec, wt_spec, vec_spec]
        operands = (xp, wt, b2)

    out = pl.pallas_call(
        kernel,
        out_shape=jax.ShapeDtypeStruct((B_pad, C_pad), out_dtype),
        grid_spec=pltpu.PrefetchScalarGridSpec(
            num_scalar_prefetch=0,
            grid=grid,
            in_specs=in_specs,
            out_specs=out_spec,
        ),
        compiler_params=pltpu.CompilerParams(
            dimension_semantics=("parallel",),
            vmem_limit_bytes=vmem_limit,
        ),
    )(*operands)

    return out[:B, :C]


def sepfc_forward(x, weight, bias, gamma=None, beta=None, *, norm=False, block_b=512):
    """SepFC forward.  x: [B, D]; weight: [C, D] (head c's Linear(in_dim, 1) weight);
    bias: [C]; gamma/beta: [C, D] per-head LayerNorm affine (norm=True only)."""
    return _sepfc_forward_impl(
        x, weight, bias, gamma, beta,
        norm=norm, block_b=block_b,
        single_buf=_single_buffer_supported(),
        vmem_cap=_vmem_limit_cap())


# --------------------------------------------------------------------------- #
# Pure-JAX reference (f32) and self-test
# --------------------------------------------------------------------------- #
def _reference(x, weight, bias, gamma=None, beta=None, *, norm=False):
    xf = x.astype(jnp.float32)
    if norm:
        mu = jnp.mean(xf, axis=-1, keepdims=True)
        var = jnp.mean((xf - mu) ** 2, axis=-1, keepdims=True)
        xhat = (xf - mu) / jnp.sqrt(var + LN_EPS)
        ln = xhat[:, None, :] * gamma[None, :, :] + beta[None, :, :]     # [B, C, D]
        return jnp.sum(ln * weight[None, :, :], axis=-1) + bias[None, :]
    return xf @ weight.T.astype(jnp.float32) + bias[None, :]


if __name__ == "__main__":
    B, D, C = 16, 32, 5          # batch, in_dim, num_classes
    key = jax.random.PRNGKey(0)
    kx, kw, kb, kg, kbe = jax.random.split(key, 5)

    x = jax.random.normal(kx, (B, D), dtype=jnp.float32)
    weight = jax.random.normal(kw, (C, D), dtype=jnp.float32) * 0.1      # per-head Linear(in_dim, 1)
    bias = jax.random.normal(kb, (C,), dtype=jnp.float32) * 0.1
    gamma = 1.0 + 0.1 * jax.random.normal(kg, (C, D), dtype=jnp.float32)  # per-head LN affine
    beta = 0.1 * jax.random.normal(kbe, (C, D), dtype=jnp.float32)

    # norm=False path (module default)
    out_plain = sepfc_forward(x, weight, bias, norm=False)
    jax.block_until_ready(out_plain)
    ref_plain = _reference(x, weight, bias, norm=False)

    # norm=True path (per-head LayerNorm folded into effective weight / colsum / bias)
    out_norm = sepfc_forward(x, weight, bias, gamma, beta, norm=True)
    jax.block_until_ready(out_norm)
    ref_norm = _reference(x, weight, bias, gamma, beta, norm=True)

    # bf16-activation path: x DMA'd at 2 B/elem, output emitted in bf16.
    out_norm_bf16 = sepfc_forward(x.astype(jnp.bfloat16), weight, bias, gamma, beta, norm=True)
    jax.block_until_ready(out_norm_bf16)

    assert out_plain.shape == (B, C) and out_norm.shape == (B, C)
    assert out_norm_bf16.shape == (B, C) and out_norm_bf16.dtype == jnp.bfloat16
    # MXU operands are bf16 (f32 accumulation) -> compare at bf16-appropriate tolerance.
    assert jnp.allclose(out_plain, ref_plain, atol=2e-2, rtol=2e-2)
    assert jnp.allclose(out_norm, ref_norm, atol=2e-2, rtol=2e-2)
    assert jnp.allclose(out_norm_bf16.astype(jnp.float32), ref_norm, atol=4e-2, rtol=4e-2)
    print("KERNEL_OK")
</pallas_src>

<mosaic_0001>
module attributes {stable_mosaic.version = 11 : i64} {
  func.func @_sepfc_plain_kernel(%arg0: i32, %arg1: memref<8x32xf32, #tpu.memory_space<vmem>>, %arg2: memref<32x128xbf16, #tpu.memory_space<vmem>>, %arg3: memref<1x128xf32, #tpu.memory_space<vmem>>, %arg4: memref<8x128xf32, #tpu.memory_space<vmem>>) attributes {dimension_semantics = [#tpu.dimension_semantics<parallel>], iteration_bounds = array<i64: 2>, scalar_prefetch = 0 : i64, scratch_operands = 0 : i64, tpu.core_type = #tpu.core_type<tc>, window_params = [{transform_indices = @transform_0, window_bounds = array<i64: 8, 32>}, {pipeline_mode = #tpu.pipeline_mode<synchronous>, transform_indices = @transform_1, window_bounds = array<i64: 32, 128>}, {pipeline_mode = #tpu.pipeline_mode<synchronous>, transform_indices = @transform_2, window_bounds = array<i64: 1, 128>}, {transform_indices = @transform_3, window_bounds = array<i64: 8, 128>}]} {
    %c0 = arith.constant 0 : index
    %c0_0 = arith.constant 0 : index
    %0 = vector.load %arg1[%c0, %c0_0] : memref<8x32xf32, #tpu.memory_space<vmem>>, vector<8x32xf32>
    %1 = arith.truncf %0 : vector<8x32xf32> to vector<8x32xbf16>
    %c0_1 = arith.constant 0 : index
    %c0_2 = arith.constant 0 : index
    %2 = vector.load %arg2[%c0_1, %c0_2] : memref<32x128xbf16, #tpu.memory_space<vmem>>, vector<32x128xbf16>
    %cst = arith.constant dense<0.000000e+00> : vector<8x128xf32>
    %3 = tpu.matmul %1, %2, %cst {dimension_numbers = #tpu.dot_dimension_numbers<[1], [0], [0], [1], [0, 0, 1, 1], [], []>} : vector<8x32xbf16>, vector<32x128xbf16>, vector<8x128xf32> -> vector<8x128xf32>
    %c0_3 = arith.constant 0 : index
    %c0_4 = arith.constant 0 : index
    %4 = vector.load %arg3[%c0_3, %c0_4] : memref<1x128xf32, #tpu.memory_space<vmem>>, vector<1x128xf32>
    %5 = vector.broadcast %4 : vector<1x128xf32> to vector<8x128xf32>
    %6 = arith.addf %3, %5 : vector<8x128xf32>
    %c0_5 = arith.constant 0 : index
    %c0_6 = arith.constant 0 : index
    %7 = vector.load %arg4[%c0_5, %c0_6] : memref<8x128xf32, #tpu.memory_space<vmem>>, vector<8x128xf32>
    tpu.vector_store %arg4[%c0_5, %c0_6], %6 {strides = array<i32>} : memref<8x128xf32, #tpu.memory_space<vmem>>, vector<8x128xf32>,
    return
  }
  func.func @transform_0(%arg0: i32) -> (i32, i32) {
    %c0_i32 = arith.constant 0 : i32
    %c0_i32_0 = arith.constant 0 : i32
    return %arg0, %c0_i32 : i32, i32
  }
  func.func @transform_1(%arg0: i32) -> (i32, i32) {
    %c0_i32 = arith.constant 0 : i32
    %c0_i32_0 = arith.constant 0 : i32
    %c0_i32_1 = arith.constant 0 : i32
    return %c0_i32, %c0_i32_0 : i32, i32
  }
  func.func @transform_2(%arg0: i32) -> (i32, i32) {
    %c0_i32 = arith.constant 0 : i32
    %c0_i32_0 = arith.constant 0 : i32
    %c0_i32_1 = arith.constant 0 : i32
    return %c0_i32, %c0_i32_0 : i32, i32
  }
  func.func @transform_3(%arg0: i32) -> (i32, i32) {
    %c0_i32 = arith.constant 0 : i32
    %c0_i32_0 = arith.constant 0 : i32
    return %arg0, %c0_i32 : i32, i32
  }
}

</mosaic_0001>

<llo_original>
// kernel: _sepfc_forward_impl.1
$region0: #{_sepfc_forward_impl.1}
  #allocation0 [shape = 'u32[]', space=smem, size = 0x4, offset = 0x4, fixed_abs, tag = 'smem constant byte address 0x4 - core index']
  #allocation1 [shape = 'u32[144,128]{1,0:T(1,128)}', space=vmem, size = 0x12000, scoped, tag = 'internal scratch']
  %s0 = inlined_call_operand.vmem [shape: f32[16,32], index: 0, kind: input, shape index: {}]
  %s1 = inlined_call_operand.vmem [shape: bf16[32,128], index: 1, kind: input, shape index: {}]
  %s2 = inlined_call_operand.vmem [shape: f32[1,128], index: 2, kind: input, shape index: {}]
  %s3 = inlined_call_operand.vmem [shape: f32[16,128], index: 3, kind: output, shape index: {}]
  %s4 = sld [smem:[#allocation0]]
  $region45: #{_sepfc_forward_impl.1} parent=0
    _
  %s6 = ssub.s32 1, %s4
  %s7 = scalar_select 0, %s6, %s4
  loop: start=0, step=1, limit=4
  $region2: #{_sepfc_forward_impl.1} parent=0 // loop_pre_header
    _
  $region3: #{_sepfc_forward_impl.1} parent=0 // loop_header
    %s9 = sphi 0, %s13
    %p10 = scmp.ge.s32.totalorder %s9, 4
    %s19 = sphi 0, %s21
    %s22 = sphi 0, %s19
    %s23 = sphi 0, %s22
    %s39 = sphi 0, %s23
    %s43 = sphi 0, %s43
    %s45 = sphi 0, %s43
    %s46 = sphi 0, %s45
    %s60 = sphi 0, %s46
    %s64 = sphi 0, %s64
    %s66 = sphi 0, %s64
    %s67 = sphi 0, %s66
    %s81 = sphi 0, %s67
    %s87 = sphi 0, %s89
    %s90 = sphi 0, %s87
    %s91 = sphi 0, %s90
    %s107 = sphi 0, %s91
  $region4: #{_sepfc_forward_impl.1} parent=0 // loop_header_branch
    %12 = sbr.rel (%p10) target = $region8
  $region5: #{_sepfc_forward_impl.1} parent=0 // loop_body
    %s14 = ssub.s32 %s9, 1
    %s15 = ssub.s32 %s9, 2
    %s16 = sadd.s32 %s9, 1
    %s17 = ssub.s32 %s9, %s16
    %p18 = scmp.eq.s32.totalorder %s17, 0
    %s20 = sadd.s32 %s19, 1
    %s21 = scalar_select %p18, %s19, %s20
    %p24 = pneg %p18
    %p25 = scmp.eq.s32.totalorder %s9, 1
    %p26 = por %p24, %p25
    %p27 = scmp.ne.s32.totalorder %s19, %s22
    %p28 = scmp.eq.s32.totalorder %s9, 0
    %p29 = por %p27, %p28
    %p30 = scmp.ne.s32.totalorder %s19, %s22
    %p31 = scmp.eq.s32.totalorder %s14, 1
    %p32 = por %p30, %p31
    %p33 = scmp.ne.s32.totalorder %s22, %s23
    %p34 = scmp.eq.s32.totalorder %s14, 0
    %p35 = por %p33, %p34
    %p36 = scmp.ne.s32.totalorder %s22, %s23
    %p37 = scmp.eq.s32.totalorder %s15, 1
    %p38 = por %p36, %p37
    %p40 = scmp.ne.s32.totalorder %s23, %s39
    %p41 = scmp.eq.s32.totalorder %s15, 0
    %p42 = por %p40, %p41
    %s44 = sadd.s32 %s43, 1
    %p47 = scmp.eq.s32.totalorder %s9, 1
    %p48 = scmp.ne.s32.totalorder %s43, %s45
    %p49 = scmp.eq.s32.totalorder %s9, 0
    %p50 = por %p48, %p49
    %p51 = scmp.ne.s32.totalorder %s43, %s45
    %p52 = scmp.eq.s32.totalorder %s14, 1
    %p53 = por %p51, %p52
    %p54 = scmp.ne.s32.totalorder %s45, %s46
    %p55 = scmp.eq.s32.totalorder %s14, 0
    %p56 = por %p54, %p55
    %p57 = scmp.ne.s32.totalorder %s45, %s46
    %p58 = scmp.eq.s32.totalorder %s15, 1
    %p59 = por %p57, %p58
    %p61 = scmp.ne.s32.totalorder %s46, %s60
    %p62 = scmp.eq.s32.totalorder %s15, 0
    %p63 = por %p61, %p62
    %s65 = sadd.s32 %s64, 1
    %p68 = scmp.eq.s32.totalorder %s9, 1
    %p69 = scmp.ne.s32.totalorder %s64, %s66
    %p70 = scmp.eq.s32.totalorder %s9, 0
    %p71 = por %p69, %p70
    %p72 = scmp.ne.s32.totalorder %s64, %s66
    %p73 = scmp.eq.s32.totalorder %s14, 1
    %p74 = por %p72, %p73
    %p75 = scmp.ne.s32.totalorder %s66, %s67
    %p76 = scmp.eq.s32.totalorder %s14, 0
    %p77 = por %p75, %p76
    %p78 = scmp.ne.s32.totalorder %s66, %s67
    %p79 = scmp.eq.s32.totalorder %s15, 1
    %p80 = por %p78, %p79
    %p82 = scmp.ne.s32.totalorder %s67, %s81
    %p83 = scmp.eq.s32.totalorder %s15, 0
    %p84 = por %p82, %p83
    %s85 = ssub.s32 %s9, %s16
    %p86 = scmp.eq.s32.totalorder %s85, 0
    %s88 = sadd.s32 %s87, 1
    %s89 = scalar_select %p86, %s87, %s88
    %p92 = pneg %p86
    %p93 = scmp.eq.s32.totalorder %s9, 1
    %p94 = por %p92, %p93
    %p95 = scmp.ne.s32.totalorder %s87, %s90
    %p96 = scmp.eq.s32.totalorder %s9, 0
    %p97 = por %p95, %p96
    %p98 = scmp.ne.s32.totalorder %s87, %s90
    %p99 = scmp.eq.s32.totalorder %s14, 1
    %p100 = por %p98, %p99
    %p101 = scmp.ne.s32.totalorder %s90, %s91
    %p102 = scmp.eq.s32.totalorder %s14, 0
    %p103 = por %p101, %p102
    %p104 = scmp.ne.s32.totalorder %s90, %s91
    %p105 = scmp.eq.s32.totalorder %s15, 1
    %p106 = por %p104, %p105
    %p108 = scmp.ne.s32.totalorder %s91, %s107
    %p109 = scmp.eq.s32.totalorder %s15, 0
    %p110 = por %p108, %p109
    %p111 = scmp.le.s32.totalorder 1, %s9
    %p112 = scmp.lt.s32.totalorder %s9, 3
    %p113 = pnand %p111, %p112
    %p114 = pneg %p113
    // Predicated region
    $region9: #{_sepfc_forward_impl.1} parent=5 // pred_check
      _
    $region10: #{_sepfc_forward_impl.1} parent=5 // pred_check_branch
      %116 = sbr.rel (%p113) target = $region12
    $region11: #{_sepfc_forward_impl.1} parent=5 // pred_region
      %s117 = ssub.s32 %s9, 1
      // Predicated region
      $region13: #{_sepfc_forward_impl.1} parent=11 // pred_check
        %p118 = pneg %p56
      $region14: #{_sepfc_forward_impl.1} parent=11 // pred_check_branch
        %120 = sbr.rel (%p118) target = $region16
      $region15: #{_sepfc_forward_impl.1} parent=11 // pred_region
        _
      $region16: #{_sepfc_forward_impl.1} parent=11 // pred_fallthru
        _
      // Predicated region
      $region17: #{_sepfc_forward_impl.1} parent=11 // pred_check
        %p121 = pneg %p77
      $region18: #{_sepfc_forward_impl.1} parent=11 // pred_check_branch
        %123 = sbr.rel (%p121) target = $region20
      $region19: #{_sepfc_forward_impl.1} parent=11 // pred_region
        _
      $region20: #{_sepfc_forward_impl.1} parent=11 // pred_fallthru
        _
    $region12: #{_sepfc_forward_impl.1} parent=5 // pred_fallthru
      _
    %p124 = scmp.lt.s32.totalorder %s9, 2
    // Predicated region
    $region21: #{_sepfc_forward_impl.1} parent=5 // pred_check
      %p125 = pneg %p124
    $region22: #{_sepfc_forward_impl.1} parent=5 // pred_check_branch
      %127 = sbr.rel (%p125) target = $region24
    $region23: #{_sepfc_forward_impl.1} parent=5 // pred_region
      // Predicated region
      $region25: #{_sepfc_forward_impl.1} parent=23 // pred_check
        %p128 = pneg %p29
      $region26: #{_sepfc_forward_impl.1} parent=23 // pred_check_branch
        %130 = sbr.rel (%p128) target = $region28
      $region27: #{_sepfc_forward_impl.1} parent=23 // pred_region
        %p131 = scmp.lt.s32.totalorder %s9, 1
        %s132 = scalar_select %p131, %s9, 1
        %s133 = smul.addr %s132, 8
        %s134 = scalar_lea.vmem %s0, %s133
      $region28: #{_sepfc_forward_impl.1} parent=23 // pred_fallthru
        _
    $region24: #{_sepfc_forward_impl.1} parent=5 // pred_fallthru
      _
    %p135 = scmp.le.s32.totalorder 1, %s9
    %p136 = scmp.lt.s32.totalorder %s9, 3
    %p137 = pnand %p135, %p136
    %p138 = pneg %p137
    // Predicated region
    $region29: #{_sepfc_forward_impl.1} parent=5 // pred_check
      _
    $region30: #{_sepfc_forward_impl.1} parent=5 // pred_check_branch
      %140 = sbr.rel (%p137) target = $region32
    $region31: #{_sepfc_forward_impl.1} parent=5 // pred_region
      %s141 = ssub.s32 %s9, 1
      %p142 = scmp.lt.s32.totalorder %s14, 1
      %s143 = scalar_select %p142, %s14, 1
      %s144 = smul.addr %s143, 8
      %s145 = scalar_lea.vmem %s0, %s144
      %p146 = pneg %p35
      %p147 = pneg %p32
      %p148 = pneg %p56
      %p149 = pneg %p53
      %p150 = pneg %p77
      %p151 = pneg %p74
      %p152 = pneg %p103
      %p153 = pneg %p100
      %p154 = scmp.lt.s32.totalorder %s14, 1
      %s155 = scalar_select %p154, %s14, 1
      %s156 = smul.addr %s155, 8
      %s157 = scalar_lea.vmem %s3, %s156
      %p158 = scmp.lt.s32.totalorder %s14, 1
      %s159 = scalar_select %p158, %s14, 1
      %s160 = smul.addr %s159, 8
      %s161 = scalar_lea.vmem %s0, %s160
      %p162 = scmp.lt.s32.totalorder %s14, 1
      %s163 = scalar_select %p162, %s14, 1
      %s164 = smul.addr %s163, 8
      %s165 = scalar_lea.vmem %s3, %s164
      %v167 = vld [vmem:[%s161] sm:$0xff]
      %v168 = vpack.c.bf16 %v167, %v167
      %v169 = vld [vmem:[%s1] sm:$0xf]
      %v170 = vld [vmem:[%s1 + $0x4] sm:$0xf]
      %v171 = vld [vmem:[%s1 + $0x8] sm:$0xf]
      %v172 = vld [vmem:[%s1 + $0xc] sm:$0xf]
      %v173 = vld [vmem:[%s2] sm:$0x1]
      %v175 = vlaneseq
      %v176 = vshrl.u32 %v175, 7
      %v177 = vsub.s32 0, %v176
      %v178 = vrot.slane %v173, %v177
      %v184 = vunpack.c.l.b16 %v169
      %v185 = vunpack.c.l.b16 %v170
      %v186 = vunpack.c.l.b16 %v171
      %v187 = vunpack.c.l.b16 %v172
      %v188 = vpack.c.b16 %v185, %v184
      %v189 = vpack.c.b16 %v187, %v186
      %vm192 = vcmask 261120
      %v194 = vsel %vm192, %v168, 0
      %196 = vmatprep.subr.bf16.mxu0 0
      %197 = vmatpush1.bf16.msra.mxu0 %v188
      %198 = vmatprep.subr.bf16.mxu0 0
      %199 = vmatpush1.bf16.msra.mxu0 %v189
      %200 = vmatprep.subr.bf16.mxu0 0
      %201 = vmatpush1.bf16.msra.mxu0 0
      %202 = vmatprep.subr.bf16.mxu0 0
      %203 = vmatpush1.bf16.msra.mxu0 0
      %204 = vmatprep.subr.bf16.mxu0 0
      %205 = vmatpush1.bf16.msra.mxu0 0
      %206 = vmatprep.subr.bf16.mxu0 0
      %207 = vmatpush1.bf16.msra.mxu0 0
      %208 = vmatprep.subr.bf16.mxu0 0
      %209 = vmatpush1.bf16.msra.mxu0 0
      %210 = vmatprep.subr.bf16.mxu0 0
      %211 = vmatpush1.bf16.msra.mxu0 0
      %212 = vmatprep.subr.bf16.mxu0 0
      %213 = vmatpush1.bf16.msra.mxu0 0
      %214 = vmatprep.subr.bf16.mxu0 0
      %215 = vmatpush1.bf16.msra.mxu0 0
      %216 = vmatprep.subr.bf16.mxu0 0
      %217 = vmatpush1.bf16.msra.mxu0 0
      %218 = vmatprep.subr.bf16.mxu0 0
      %219 = vmatpush1.bf16.msra.mxu0 0
      %220 = vmatprep.subr.bf16.mxu0 0
      %221 = vmatpush1.bf16.msra.mxu0 0
      %222 = vmatprep.subr.bf16.mxu0 0
      %223 = vmatpush1.bf16.msra.mxu0 0
      %224 = vmatprep.subr.bf16.mxu0 0
      %225 = vmatpush1.bf16.msra.mxu0 0
      %226 = vmatprep.subr.bf16.mxu0 0
      %227 = vmatpush1.bf16.msra.mxu0 0
      %228 = vmatprep.mubr.bf16.mxu0 0
      %229 = vmatmul.mubr.bf16.gmra.mrb[0].mxu0 %v194
      %v230 = vpop.f32.mrb[0].mxu0
      %v231 = vadd.f32 %v178, %v230
      %v232 = vpop.f32.mrb[0].mxu0
      %v233 = vpop.f32.mrb[0].mxu0
      %v234 = vpop.f32.mrb[0].mxu0
      %235 = vdwg.mxu0
      %236 = vst [vmem:[%s165] sm:$0xff] %v231
      %p237 = scmp.lt.s32.totalorder %s14, 1
      %s238 = scalar_select %p237, %s14, 1
      %s239 = smul.addr %s238, 8
      %s240 = scalar_lea.vmem %s3, %s239
      // Predicated region
      $region33: #{_sepfc_forward_impl.1} parent=31 // pred_check
        %p241 = pneg %p100
      $region34: #{_sepfc_forward_impl.1} parent=31 // pred_check_branch
        %243 = sbr.rel (%p241) target = $region36
      $region35: #{_sepfc_forward_impl.1} parent=31 // pred_region
        _
      $region36: #{_sepfc_forward_impl.1} parent=31 // pred_fallthru
        _
    $region32: #{_sepfc_forward_impl.1} parent=5 // pred_fallthru
      _
    %p244 = scmp.le.s32.totalorder 2, %s9
    // Predicated region
    $region37: #{_sepfc_forward_impl.1} parent=5 // pred_check
      %p245 = pneg %p244
    $region38: #{_sepfc_forward_impl.1} parent=5 // pred_check_branch
      %247 = sbr.rel (%p245) target = $region40
    $region39: #{_sepfc_forward_impl.1} parent=5 // pred_region
      %s248 = ssub.s32 %s9, 2
      // Predicated region
      $region41: #{_sepfc_forward_impl.1} parent=39 // pred_check
        %p249 = pneg %p106
      $region42: #{_sepfc_forward_impl.1} parent=39 // pred_check_branch
        %251 = sbr.rel (%p249) target = $region44
      $region43: #{_sepfc_forward_impl.1} parent=39 // pred_region
        %p252 = scmp.lt.s32.totalorder %s15, 1
        %s253 = scalar_select %p252, %s15, 1
        %s254 = smul.addr %s253, 8
        %s255 = scalar_lea.vmem %s3, %s254
      $region44: #{_sepfc_forward_impl.1} parent=39 // pred_fallthru
        _
    $region40: #{_sepfc_forward_impl.1} parent=5 // pred_fallthru
      _
  $region6: #{_sepfc_forward_impl.1} parent=0 // loop_footer
    %s13 = sadd.s32 1, %s9
  $region7: #{_sepfc_forward_impl.1} parent=0 // loop_footer_branch
    %8 = sbr.rel target = $region3
  $region8: #{_sepfc_forward_impl.1} parent=0 // loop_exit
    _

</llo_original>
